<compile_context>
chip_gen: v7x
topology: tpu7x:2x2x1
jax: 0.10.0
libtpu: 0.0.40
codegen_flags: <defaults>
</compile_context>

<pallas_src>
import math

import jax
import jax.numpy as jnp
from jax.experimental import pallas as pl
from jax.experimental.pallas import tpu as pltpu


_NEG_LOG_EPS = float(math.log(1e6))  # == -log(1e-6), the clamp on -log(p)


def _make_cel_kernel(n_rows, tile_rows, tiles_per_group, n_classes):
    def kernel(x_ref, t_ref, out_ref, acc_ref):
        g = pl.program_id(0)          # group (megacore) axis
        i = pl.program_id(1)          # reduction axis over row tiles

        # Zero the per-group accumulator at the start of each group's sweep.
        @pl.when(i == 0)
        def _():
            acc_ref[...] = jnp.zeros_like(acc_ref)

        x = x_ref[...].astype(jnp.float32)   # (TR, C) logits (native dtype in HBM)
        t = t_ref[...]                       # (TR, C) targets (native dtype)

        # Numerically-stable log-softmax over the lane (class) axis.
        m = jnp.max(x, axis=-1, keepdims=True)
        e = jnp.exp(x - m)
        sum_e = jnp.sum(e, axis=-1, keepdims=True)
        lse = m + jnp.log(sum_e)                                   # per-row log-sum-exp
        p = jnp.maximum(e * pl.reciprocal(sum_e, approx=True), 1e-6)

        # pos: -log(clamp(softmax, 1e-6)) == min(lse - x, -log(1e-6))  (no full-tile log)
        pos_term = jnp.minimum(lse - x, _NEG_LOG_EPS)
        # neg: -log(clamp(1 - p, 1e-6))
        neg_term = -jnp.log(jnp.maximum(1.0 - p, 1e-6))

        # Single fused select chain (elements that are neither 0 nor 1 contribute 0).
        loss_elem = jnp.where(t == 1, pos_term,
                              jnp.where(t == 0, neg_term, 0.0))

        # Mask out-of-bounds tail rows (last tile may run past N; no wrapper padding).
        block_idx = g * tiles_per_group + i
        row0 = block_idx * tile_rows
        rows = row0 + jax.lax.broadcasted_iota(jnp.int32, (tile_rows, n_classes), 0)
        loss_elem = jnp.where(rows < n_rows, loss_elem, 0.0)

        # Accumulate per-lane (per-class) partials; no scalar RMW in the hot loop.
        acc_ref[...] += jnp.sum(loss_elem, axis=0, keepdims=True)

        # Write the group's partial out once, at the end of its sweep.
        @pl.when(i == tiles_per_group - 1)
        def _():
            out_ref[0] = acc_ref[...]

    return kernel


def cel_loss(out, target, *, tile_rows=None, vmem_budget_bytes=20 << 20):
    """Pallas implementation of CEL.forward(out, target) -> scalar loss."""
    assert out.shape == target.shape
    C = out.shape[-1]
    x = out.reshape(-1, C)        # native dtype, no extra HBM pass
    t = target.reshape(-1, C)     # native dtype, no extra HBM pass
    N = x.shape[0]

    x_bytes = x.dtype.itemsize
    t_bytes = t.dtype.itemsize

    # Tile sizing: 2 inputs x 2 pipeline buffers x tile_rows x C x bytes <= budget,
    # capped at 2048 rows, multiple of 8, and no bigger than the (rounded-up) row count.
    rows_rounded = max(8, ((N + 7) // 8) * 8)
    if tile_rows is None:
        per_row = C * (x_bytes + t_bytes) * 2  # 2 pipeline buffers per input
        tile_rows = min(vmem_budget_bytes // max(per_row, 1), 2048)
    tile_rows = min(int(tile_rows), rows_rounded)
    tile_rows = max(8, (tile_rows // 8) * 8)

    n_tiles = -(-N // tile_rows)
    n_groups = 2 if n_tiles >= 2 else 1            # split rows across v7x's 2 TCs
    tiles_per_group = -(-n_tiles // n_groups)
    last_tile = n_tiles - 1

    def in_index_map(g, i):
        # Clamp so the duplicated tail block of an uneven split stays in-bounds;
        # the kernel masks its rows to zero via the (unclamped) row index.
        return (jnp.minimum(g * tiles_per_group + i, last_tile), 0)

    kernel = _make_cel_kernel(N, tile_rows, tiles_per_group, C)

    partials = pl.pallas_call(
        kernel,
        out_shape=jax.ShapeDtypeStruct((n_groups, 1, C), jnp.float32),
        grid_spec=pltpu.PrefetchScalarGridSpec(
            num_scalar_prefetch=0,
            grid=(n_groups, tiles_per_group),
            in_specs=[
                pl.BlockSpec((tile_rows, C), in_index_map),
                pl.BlockSpec((tile_rows, C), in_index_map),
            ],
            out_specs=pl.BlockSpec((1, 1, C), lambda g, i: (g, 0, 0)),
            scratch_shapes=[pltpu.VMEM((1, C), jnp.float32)],
        ),
        compiler_params=pltpu.CompilerParams(
            dimension_semantics=("parallel", "arbitrary"),
            vmem_limit_bytes=32 * 1024 * 1024,
        ),
        cost_estimate=pl.CostEstimate(
            flops=10 * N * C,
            transcendentals=2 * N * C + 2 * N,
            bytes_accessed=N * C * (x_bytes + t_bytes) + n_groups * C * 4,
        ),
    )(x, t)
    return jnp.sum(partials)


def _ref_cel(out, target):
    """Pure-JAX reference mirroring the PyTorch forward."""
    p = jax.nn.softmax(out.astype(jnp.float32), axis=-1)
    p = jnp.maximum(p, 1e-6)
    pos = jnp.where(target == 1, -jnp.log(p), 0.0).sum()
    neg = jnp.where(target == 0, -jnp.log(jnp.maximum(1.0 - p, 1e-6)), 0.0).sum()
    return pos + neg


if __name__ == "__main__":
    key = jax.random.PRNGKey(0)
    k1, k2, k3, k4 = jax.random.split(key, 4)

    # Test 1: shapes consistent with the module (batch=2, seq=8, classes=16).
    B, S, C = 2, 8, 16
    out1 = jax.random.normal(k1, (B, S, C), dtype=jnp.float32)
    tgt1 = jax.random.bernoulli(k2, p=0.25, shape=(B, S, C)).astype(jnp.float32)
    loss1 = jax.block_until_ready(cel_loss(out1, tgt1))
    ref1 = jax.block_until_ready(_ref_cel(out1, tgt1))
    assert jnp.allclose(loss1, ref1, rtol=5e-3, atol=5e-3), (loss1, ref1)

    # Test 2: row count not a multiple of the tile + forced small tile, to exercise
    # the in-kernel tail masking and the 2-group (megacore) grid path.
    B2, S2, C2 = 3, 39, 16
    out2 = jax.random.normal(k3, (B2, S2, C2), dtype=jnp.float32)
    tgt2 = jax.random.bernoulli(k4, p=0.25, shape=(B2, S2, C2)).astype(jnp.float32)
    loss2 = jax.block_until_ready(cel_loss(out2, tgt2, tile_rows=8))
    ref2 = jax.block_until_ready(_ref_cel(out2, tgt2))
    assert jnp.allclose(loss2, ref2, rtol=5e-3, atol=5e-3), (loss2, ref2)

    print("KERNEL_OK")
</pallas_src>

<mosaic_0001>
module attributes {stable_mosaic.version = 11 : i64} {
  func.func @kernel(%arg0: i32, %arg1: i32, %arg2: memref<16x16xf32, #tpu.memory_space<vmem>>, %arg3: memref<16x16xf32, #tpu.memory_space<vmem>>, %arg4: memref<1x1x16xf32, #tpu.memory_space<vmem>>, %arg5: memref<1x16xf32, #tpu.memory_space<vmem>>) attributes {dimension_semantics = [#tpu.dimension_semantics<parallel>, #tpu.dimension_semantics<arbitrary>], iteration_bounds = array<i64: 1, 1>, scalar_prefetch = 0 : i64, scratch_operands = 1 : i64, tpu.core_type = #tpu.core_type<tc>, window_params = [{transform_indices = @transform_0, window_bounds = array<i64: 16, 16>}, {transform_indices = @transform_1, window_bounds = array<i64: 16, 16>}, {transform_indices = @transform_2, window_bounds = array<i64: 1, 1, 16>}]} {
    %c0_i32 = arith.constant 0 : i32
    %0 = arith.cmpi eq, %arg1, %c0_i32 : i32
    %1 = arith.extui %0 : i1 to i32
    %c0_i32_0 = arith.constant 0 : i32
    %2 = arith.cmpi ne, %1, %c0_i32_0 : i32
    scf.if %2 {
      %cst_22 = arith.constant 0.000000e+00 : f32
      %55 = vector.broadcast %cst_22 : f32 to vector<1x16xf32>
      %c0_23 = arith.constant 0 : index
      %c0_24 = arith.constant 0 : index
      %56 = vector.load %arg5[%c0_23, %c0_24] : memref<1x16xf32, #tpu.memory_space<vmem>>, vector<1x16xf32>
      tpu.vector_store %arg5[%c0_23, %c0_24], %55 {strides = array<i32>} : memref<1x16xf32, #tpu.memory_space<vmem>>, vector<1x16xf32>,
    } else {
    }
    %c0 = arith.constant 0 : index
    %c0_1 = arith.constant 0 : index
    %3 = vector.load %arg2[%c0, %c0_1] : memref<16x16xf32, #tpu.memory_space<vmem>>, vector<16x16xf32>
    %c0_2 = arith.constant 0 : index
    %c0_3 = arith.constant 0 : index
    %4 = vector.load %arg3[%c0_2, %c0_3] : memref<16x16xf32, #tpu.memory_space<vmem>>, vector<16x16xf32>
    %cst = arith.constant dense<0xFF800000> : vector<16xf32>
    %5 = vector.multi_reduction <maximumf>, %3, %cst [1] : vector<16x16xf32> to vector<16xf32>
    %6 = vector.shape_cast %5 : vector<16xf32> to vector<16x1xf32>
    %7 = vector.broadcast %6 : vector<16x1xf32> to vector<16x16xf32>
    %8 = arith.subf %3, %7 : vector<16x16xf32>
    %9 = math.exp %8 : vector<16x16xf32>
    %cst_4 = arith.constant dense<0.000000e+00> : vector<16xf32>
    %10 = vector.multi_reduction <add>, %9, %cst_4 [1] : vector<16x16xf32> to vector<16xf32>
    %11 = vector.shape_cast %10 : vector<16xf32> to vector<16x1xf32>
    %12 = math.log %11 : vector<16x1xf32>
    %13 = arith.addf %6, %12 : vector<16x1xf32>
    %14 = tpu.reciprocal %11 {approx = true} : vector<16x1xf32> -> vector<16x1xf32>
    %15 = vector.broadcast %14 : vector<16x1xf32> to vector<16x16xf32>
    %16 = arith.mulf %9, %15 : vector<16x16xf32>
    %cst_5 = arith.constant 9.99999997E-7 : f32
    %17 = vector.broadcast %cst_5 : f32 to vector<16x16xf32>
    %18 = arith.maximumf %16, %17 : vector<16x16xf32>
    %19 = vector.broadcast %13 : vector<16x1xf32> to vector<16x16xf32>
    %20 = arith.subf %19, %3 : vector<16x16xf32>
    %cst_6 = arith.constant 13.8155107 : f32
    %21 = vector.broadcast %cst_6 : f32 to vector<16x16xf32>
    %22 = arith.minimumf %20, %21 : vector<16x16xf32>
    %cst_7 = arith.constant 1.000000e+00 : f32
    %23 = vector.broadcast %cst_7 : f32 to vector<16x16xf32>
    %24 = arith.subf %23, %18 : vector<16x16xf32>
    %cst_8 = arith.constant 9.99999997E-7 : f32
    %25 = vector.broadcast %cst_8 : f32 to vector<16x16xf32>
    %26 = arith.maximumf %24, %25 : vector<16x16xf32>
    %27 = math.log %26 : vector<16x16xf32>
    %cst_9 = arith.constant 0.000000e+00 : f32
    %28 = vector.broadcast %cst_9 : f32 to vector<16x16xf32>
    %29 = arith.subf %28, %27 : vector<16x16xf32>
    %cst_10 = arith.constant 1.000000e+00 : f32
    %30 = vector.broadcast %cst_10 : f32 to vector<16x16xf32>
    %31 = arith.cmpf oeq, %4, %30 : vector<16x16xf32>
    %cst_11 = arith.constant 0.000000e+00 : f32
    %32 = vector.broadcast %cst_11 : f32 to vector<16x16xf32>
    %33 = arith.cmpf oeq, %4, %32 : vector<16x16xf32>
    %cst_12 = arith.constant 0.000000e+00 : f32
    %34 = vector.broadcast %cst_12 : f32 to vector<16x16xf32>
    %35 = arith.select %33, %29, %34 : vector<16x16xi1>, vector<16x16xf32>
    %36 = arith.select %31, %22, %35 : vector<16x16xi1>, vector<16x16xf32>
    %c1_i32 = arith.constant 1 : i32
    %37 = arith.muli %arg0, %c1_i32 : i32
    %38 = arith.addi %37, %arg1 : i32
    %c16_i32 = arith.constant 16 : i32
    %39 = arith.muli %38, %c16_i32 : i32
    %40 = tpu.iota {dimensions = array<i32: 0>} : vector<16x16xi32>
    %41 = vector.broadcast %39 : i32 to vector<16x16xi32>
    %42 = arith.addi %41, %40 : vector<16x16xi32>
    %c16_i32_13 = arith.constant 16 : i32
    %43 = vector.broadcast %c16_i32_13 : i32 to vector<16x16xi32>
    %44 = arith.cmpi slt, %42, %43 : vector<16x16xi32>
    %cst_14 = arith.constant 0.000000e+00 : f32
    %45 = vector.broadcast %cst_14 : f32 to vector<16x16xf32>
    %46 = arith.select %44, %36, %45 : vector<16x16xi1>, vector<16x16xf32>
    %c0_15 = arith.constant 0 : index
    %c0_16 = arith.constant 0 : index
    %47 = vector.load %arg5[%c0_15, %c0_16] : memref<1x16xf32, #tpu.memory_space<vmem>>, vector<1x16xf32>
    %cst_17 = arith.constant dense<0.000000e+00> : vector<16xf32>
    %48 = vector.multi_reduction <add>, %46, %cst_17 [0] : vector<16x16xf32> to vector<16xf32>
    %49 = vector.shape_cast %48 : vector<16xf32> to vector<1x16xf32>
    %50 = arith.addf %47, %49 : vector<1x16xf32>
    %c0_18 = arith.constant 0 : index
    %c0_19 = arith.constant 0 : index
    %51 = vector.load %arg5[%c0_18, %c0_19] : memref<1x16xf32, #tpu.memory_space<vmem>>, vector<1x16xf32>
    tpu.vector_store %arg5[%c0_18, %c0_19], %50 {strides = array<i32>} : memref<1x16xf32, #tpu.memory_space<vmem>>, vector<1x16xf32>,
    %c0_i32_20 = arith.constant 0 : i32
    %52 = arith.cmpi eq, %arg1, %c0_i32_20 : i32
    %53 = arith.extui %52 : i1 to i32
    %c0_i32_21 = arith.constant 0 : i32
    %54 = arith.cmpi ne, %53, %c0_i32_21 : i32
    scf.if %54 {
      %c0_22 = arith.constant 0 : index
      %c0_23 = arith.constant 0 : index
      %55 = vector.load %arg5[%c0_22, %c0_23] : memref<1x16xf32, #tpu.memory_space<vmem>>, vector<1x16xf32>
      %c0_24 = arith.constant 0 : index
      %c0_25 = arith.constant 0 : index
      %c0_26 = arith.constant 0 : index
      %56 = vector.load %arg4[%c0_24, %c0_25, %c0_26] : memref<1x1x16xf32, #tpu.memory_space<vmem>>, vector<1x1x16xf32>
      %57 = vector.shape_cast %56 : vector<1x1x16xf32> to vector<1x16xf32>
      %58 = vector.shape_cast %55 : vector<1x16xf32> to vector<1x1x16xf32>
      tpu.vector_store %arg4[%c0_24, %c0_25, %c0_26], %58 {strides = array<i32>} : memref<1x1x16xf32, #tpu.memory_space<vmem>>, vector<1x1x16xf32>,
    } else {
    }
    return
  }
  func.func @transform_0(%arg0: i32, %arg1: i32) -> (i32, i32) {
    %c1_i32 = arith.constant 1 : i32
    %0 = arith.muli %arg0, %c1_i32 : i32
    %1 = arith.addi %0, %arg1 : i32
    %c0_i32 = arith.constant 0 : i32
    %2 = arith.minsi %1, %c0_i32 : i32
    %c0_i32_0 = arith.constant 0 : i32
    %c0_i32_1 = arith.constant 0 : i32
    return %2, %c0_i32_0 : i32, i32
  }
  func.func @transform_1(%arg0: i32, %arg1: i32) -> (i32, i32) {
    %c1_i32 = arith.constant 1 : i32
    %0 = arith.muli %arg0, %c1_i32 : i32
    %1 = arith.addi %0, %arg1 : i32
    %c0_i32 = arith.constant 0 : i32
    %2 = arith.minsi %1, %c0_i32 : i32
    %c0_i32_0 = arith.constant 0 : i32
    %c0_i32_1 = arith.constant 0 : i32
    return %2, %c0_i32_0 : i32, i32
  }
  func.func @transform_2(%arg0: i32, %arg1: i32) -> (i32, i32, i32) {
    %c0_i32 = arith.constant 0 : i32
    %c0_i32_0 = arith.constant 0 : i32
    %c0_i32_1 = arith.constant 0 : i32
    return %arg0, %c0_i32, %c0_i32_0 : i32, i32, i32
  }
}

</mosaic_0001>

<llo_original>
// kernel: tpu_custom_call.1
$region0: #{tpu_custom_call.1}
  #allocation0 [shape = 'u32[]', space=smem, size = 0x4, offset = 0x4, fixed_abs, tag = 'smem constant byte address 0x4 - core index']
  #allocation1 [shape = 'u32[144,128]{1,0:T(1,128)}', space=vmem, size = 0x12000, scoped, tag = 'internal scratch']
  #allocation2 [shape = 'f32[1,16]{1,0:T(1,128)}', space=vmem, size = 0x200, scoped, tag = 'scratch operand']
  %s0 = inlined_call_operand.hbm [shape: f32[16,16], index: 0, kind: input, shape index: {}]
  %s1 = inlined_call_operand.hbm [shape: f32[16,16], index: 1, kind: input, shape index: {}]
  %s2 = inlined_call_operand.hbm [shape: f32[1,1,16], index: 2, kind: output, shape index: {}]
  %s3 = sld [smem:[#allocation0]]
  $region34: #{tpu_custom_call.1} parent=0
    _
  %s5 = ssub.s32 1, %s3
  %s6 = scalar_select 0, %s5, %s3
  $region1: #{tpu_custom_call.1} parent=0
    #allocation3 [shape = 'u8[8192]{0}', space=vmem, size = 0x2000, scoped, tag = 'input window, operand 0, single buffered']
    #allocation4 [shape = 's32[1]{0}', space=sflag, size = 0x4, scoped, tag = 'scoped memory for tpu_custom_call.1']
    #allocation5 [shape = 's32[1]{0}', space=sflag, size = 0x4, scoped, tag = 'scoped memory for tpu_custom_call.1']
    #allocation6 [shape = 'u8[8192]{0}', space=vmem, size = 0x2000, scoped, tag = 'input window, operand 1, single buffered']
    #allocation7 [shape = 's32[1]{0}', space=sflag, size = 0x4, scoped, tag = 'scoped memory for tpu_custom_call.1']
    #allocation8 [shape = 'u8[512]{0}', space=vmem, size = 0x400, scoped, tag = 'output window, operand 0, single buffered']
    %7 = vsyncpa [#allocation4], 0
    %8 = vsyncpa [#allocation7], 0
    %9 = vsyncpa [#allocation5], 0
    // Predicated region
    $region2: #{tpu_custom_call.1} parent=1 // pred_check
      _
    $region3: #{tpu_custom_call.1} parent=1 // pred_check_branch
      %11 = sbr.rel (0) target = $region5
    $region4: #{tpu_custom_call.1} parent=1 // pred_region
      %s12 = sadd.s32 0, 0
      %p13 = scmp.lt.s32.totalorder %s12, 0
      %s14 = scalar_select %p13, %s12, 0
      %s15 = smul.u32 2, %s14
      %s17 = ssub.s32 256, 256
      %18 = vsyncadd [#allocation4], %s17
      %s19 = smul.addr %s15, 128
      %s20 = scalar_lea.hbm %s0, %s19
      %s21 = sshll.u32 [#allocation3], 4
      %s22 = int_to_ptr.vmem [resolvable:$true] %s21
      %27 = dma.hbm_to_vmem [thread:$0]  %s20, 256, %s22, [#allocation4], 128, 128, 8
    $region5: #{tpu_custom_call.1} parent=1 // pred_fallthru
      _
    // Predicated region
    $region6: #{tpu_custom_call.1} parent=1 // pred_check
      _
    $region7: #{tpu_custom_call.1} parent=1 // pred_check_branch
      %29 = sbr.rel (0) target = $region9
    $region8: #{tpu_custom_call.1} parent=1 // pred_region
      %s30 = sadd.s32 0, 0
      %p31 = scmp.lt.s32.totalorder %s30, 0
      %s32 = scalar_select %p31, %s30, 0
      %s33 = smul.u32 2, %s32
      %s35 = ssub.s32 256, 256
      %36 = vsyncadd [#allocation7], %s35
      %s37 = smul.addr %s33, 128
      %s38 = scalar_lea.hbm %s1, %s37
      %s39 = sshll.u32 [#allocation6], 4
      %s40 = int_to_ptr.vmem [resolvable:$true] %s39
      %45 = dma.hbm_to_vmem [thread:$0]  %s38, 256, %s40, [#allocation7], 128, 128, 8
    $region9: #{tpu_custom_call.1} parent=1 // pred_fallthru
      _
    // Predicated region
    $region10: #{tpu_custom_call.1} parent=1 // pred_check
      _
    $region11: #{tpu_custom_call.1} parent=1 // pred_check_branch
      %47 = sbr.rel (0) target = $region13
    $region12: #{tpu_custom_call.1} parent=1 // pred_region
      %48 = dma.done [#allocation4], 256
    $region13: #{tpu_custom_call.1} parent=1 // pred_fallthru
      _
    // Predicated region
    $region14: #{tpu_custom_call.1} parent=1 // pred_check
      _
    $region15: #{tpu_custom_call.1} parent=1 // pred_check_branch
      %50 = sbr.rel (0) target = $region17
    $region16: #{tpu_custom_call.1} parent=1 // pred_region
      %51 = dma.done [#allocation7], 256
    $region17: #{tpu_custom_call.1} parent=1 // pred_fallthru
      _
    %s52 = sadd.s32 0, 0
    %p53 = scmp.lt.s32.totalorder %s52, 0
    %s54 = scalar_select %p53, %s52, 0
    %s55 = smul.u32 2, %s54
    %s56 = sadd.s32 0, 0
    %p57 = scmp.lt.s32.totalorder %s56, 0
    %s58 = scalar_select %p57, %s56, 0
    %s59 = smul.u32 2, %s58
    %p60 = scmp.eq.s32.totalorder 0, 0
    // Predicated region
    $region18: #{tpu_custom_call.1} parent=1 // pred_check
      %p61 = pneg %p60
    $region19: #{tpu_custom_call.1} parent=1 // pred_check_branch
      %63 = sbr.rel (%p61) target = $region21
    $region20: #{tpu_custom_call.1} parent=1 // pred_region
      %vm64 = vcmask 122880
      %65 = vst.msk [vmem:[#allocation2] sm:$0x1] %vm64, 0.0
    $region21: #{tpu_custom_call.1} parent=1 // pred_fallthru
      _
    %v66 = vld [vmem:[#allocation3] sm:$0xff]
    %v67 = vld [vmem:[#allocation3 + $0x8] sm:$0xff]
    %v68 = vld [vmem:[#allocation6] sm:$0xff]
    %v69 = vld [vmem:[#allocation6 + $0x8] sm:$0xff]
    %vm70 = vcmask 130048
    %v71 = vsel %vm70, %v66, -inf
    %72 = vmax.xlane.f32.xlu0 %v71
    %v73 = vpop.xlane.xlu0 %72
    %v74 = vsel %vm70, %v67, -inf
    %75 = vmax.xlane.f32.xlu0 %v74
    %v76 = vpop.xlane.xlu0 %75
    %v77 = vsub.f32 %v66, %v73
    %v78 = vsub.f32 %v67, %v76
    %v79 = vmul.f32 %v77, 1.442695
    %v80 = vpow.pop %v79
    %v81 = vmul.f32 %v78, 1.442695
    %v82 = vpow.pop %v81
    %v83 = vsel %vm70, %v80, 0.0
    %84 = vadd.xlane.f32.xlu0 %v83
    %v85 = vpop.xlane.xlu0 %84
    %v86 = vsel %vm70, %v82, 0.0
    %87 = vadd.xlane.f32.xlu0 %v86
    %v88 = vpop.xlane.xlu0 %87
    %v89 = vlog2.pop %v85
    %v90 = vmul.f32 %v89, 0.6931472
    %v91 = vlog2.pop %v88
    %v92 = vmul.f32 %v91, 0.6931472
    %v93 = vadd.f32 %v73, %v90
    %v94 = vadd.f32 %v76, %v92
    %v95 = vrcp.pop %v85
    %v96 = vrcp.pop %v88
    %v97 = vmul.f32 %v80, %v95
    %v98 = vmul.f32 %v82, %v96
    %v99 = vmax.f32 %v97, 1e-06
    %v100 = vmax.f32 %v98, 1e-06
    %v101 = vsub.f32 %v93, %v66
    %v102 = vsub.f32 %v94, %v67
    %v103 = vmin.f32 %v101, 13.815511
    %v104 = vmin.f32 %v102, 13.815511
    %v105 = vsub.f32 1.0, %v99
    %v106 = vsub.f32 1.0, %v100
    %v107 = vmax.f32 %v105, 1e-06
    %v108 = vmax.f32 %v106, 1e-06
    %v109 = vlog2.pop %v107
    %v110 = vmul.f32 %v109, 0.6931472
    %v111 = vlog2.pop %v108
    %v112 = vmul.f32 %v111, 0.6931472
    %v113 = vsub.f32 0.0, %v110
    %v114 = vsub.f32 0.0, %v112
    %vm115 = vcmp.eq.f32.partialorder %v68, 1.0
    %vm116 = vcmp.eq.f32.partialorder %v69, 1.0
    %vm117 = vcmp.eq.f32.partialorder %v68, 0.0
    %vm118 = vcmp.eq.f32.partialorder %v69, 0.0
    %v119 = vsel %vm117, %v113, 0.0
    %v120 = vsel %vm118, %v114, 0.0
    %v121 = vsel %vm115, %v103, %v119
    %v122 = vsel %vm116, %v104, %v120
    %s123 = sadd.s32 0, 0
    %s124 = smul.u32 %s123, 16
    %v125 = vlaneseq
    %v126 = vshrl.u32 %v125, 7
    %v127 = vadd.s32 %v126, 8
    %v128 = vstv %s124
    %v129 = vadd.s32 %v128, %v126
    %v130 = vadd.s32 %v128, %v127
    %vm131 = vcmp.lt.s32.totalorder %v129, 16
    %vm132 = vcmp.lt.s32.totalorder %v130, 16
    %v133 = vsel %vm131, %v121, 0.0
    %v134 = vsel %vm132, %v122, 0.0
    %v135 = vld [vmem:[#allocation2] sm:$0x1]
    %v136 = vsel %vm70, %v133, 0.0
    %v137 = vsel %vm70, %v134, 0.0
    %v138 = vadd.f32 %v136, %v137
    %v139 = vrot.slane %v138, 4
    %v140 = vadd.f32 %v138, %v139
    %v141 = vrot.slane %v140, 2
    %v142 = vadd.f32 %v140, %v141
    %v143 = vrot.slane %v142, 1
    %v144 = vadd.f32 %v142, %v143
    %v145 = vadd.f32 %v135, %v144
    %vm146 = vcmask 122880
    %147 = vst.msk [vmem:[#allocation2] sm:$0x1] %vm146, %v145
    // Predicated region
    $region22: #{tpu_custom_call.1} parent=1 // pred_check
      %p148 = pneg %p60
    $region23: #{tpu_custom_call.1} parent=1 // pred_check_branch
      %150 = sbr.rel (%p148) target = $region25
    $region24: #{tpu_custom_call.1} parent=1 // pred_region
      %v151 = vld [vmem:[#allocation2] sm:$0x1]
      %152 = vst.msk [vmem:[#allocation8] sm:$0x1] %vm146, %v151
    $region25: #{tpu_custom_call.1} parent=1 // pred_fallthru
      _
    // Predicated region
    $region26: #{tpu_custom_call.1} parent=1 // pred_check
      _
    $region27: #{tpu_custom_call.1} parent=1 // pred_check_branch
      %154 = sbr.rel (0) target = $region29
    $region28: #{tpu_custom_call.1} parent=1 // pred_region
      %s156 = ssub.s32 16, 16
      %157 = vsyncadd [#allocation5], %s156
      %s159 = sshll.u32 [#allocation8], 4
      %s160 = int_to_ptr.vmem [resolvable:$true] %s159
      %162 = dma.vmem_to_hbm [thread:$0]  %s160, 16, %s2, [#allocation5]
    $region29: #{tpu_custom_call.1} parent=1 // pred_fallthru
      _
    // Predicated region
    $region30: #{tpu_custom_call.1} parent=1 // pred_check
      _
    $region31: #{tpu_custom_call.1} parent=1 // pred_check_branch
      %164 = sbr.rel (0) target = $region33
    $region32: #{tpu_custom_call.1} parent=1 // pred_region
      %165 = dma.done [#allocation5], 16
    $region33: #{tpu_custom_call.1} parent=1 // pred_fallthru
      _
    %166 = vsyncpa [#allocation4], 1
    %167 = vsyncpa [#allocation7], 1
    %168 = vsyncpa [#allocation5], 1

</llo_original>
